<compile_context>
chip_gen: v5e
topology: v5e:2x2
jax: 0.10.0
libtpu: 0.0.40
codegen_flags: <defaults>
</compile_context>

<pallas_src>
import functools

import jax
import jax.numpy as jnp
from jax.experimental import pallas as pl
from jax.experimental.pallas import tpu as pltpu

_LANES = 128


def _lane_partials(p, l):
    """(tile_rows,128) f32 p,l -> (1,384) lane partials [sum(p*l)|sum(p)|sum(l)]."""
    inter = jnp.sum(p * l, axis=0, keepdims=True)   # sublane reduce -> (1, 128)
    psum = jnp.sum(p, axis=0, keepdims=True)
    lsum = jnp.sum(l, axis=0, keepdims=True)
    # Single lane-dense (1, 384) slab -> one unmasked writeback per grid step.
    return jnp.concatenate([inter, psum, lsum], axis=1)


def _dice_partials_kernel(p_ref, l_ref, out_ref, *, total_rows, tile_rows):
    """One (tile_rows, 128) block -> one (1, 384) block of lane partial sums."""
    p = p_ref[...].astype(jnp.float32)
    l = l_ref[...].astype(jnp.float32)

    if total_rows % tile_rows != 0:
        # Only the LAST block over-hangs the (total_rows, 128) array; Pallas does
        # not zero the OOB part of that block, so it must be masked -- but only
        # there.  All other tiles take the unmasked fast path.
        k = pl.program_id(0)
        last = pl.num_programs(0) - 1

        @pl.when(k != last)
        def _fast():
            out_ref[...] = _lane_partials(p, l)

        @pl.when(k == last)
        def _masked():
            rows = jax.lax.broadcasted_iota(jnp.int32, p.shape, 0) + k * tile_rows
            valid = rows < total_rows
            out_ref[...] = _lane_partials(jnp.where(valid, p, 0.0),
                                          jnp.where(valid, l, 0.0))
    else:
        out_ref[...] = _lane_partials(p, l)


def _vmem_budget():
    """(target bytes per input block, vmem_limit_bytes) -- generation aware."""
    try:
        vmem_bytes = pltpu.get_tpu_info().vmem_capacity_bytes
    except Exception:
        vmem_bytes = None
    if vmem_bytes is not None and vmem_bytes >= 96 * 1024 * 1024:
        # v5e / v6e: 128 MiB physical VMEM -> big tiles amortize per-step overhead.
        return 8 * 1024 * 1024, 64 * 1024 * 1024
    # v7x (64 MiB per TensorCore) or unknown: stay conservative.
    return 4 * 1024 * 1024, 32 * 1024 * 1024


def _pick_tile_rows(num_rows, itemsize, target_block_bytes):
    rows = target_block_bytes // (_LANES * itemsize)
    # Multiple of 32 keeps bf16 (16,128) and u8 (32,128) sublane packing aligned.
    rows = max(32, (rows // 32) * 32)
    if num_rows <= rows:
        return num_rows                      # single full-extent block
    return rows


def _dice_sums(pred_2d, label_2d, tile_rows, vmem_limit_bytes):
    R = pred_2d.shape[0]
    num_tiles = (R + tile_rows - 1) // tile_rows
    kernel = functools.partial(
        _dice_partials_kernel, total_rows=R, tile_rows=tile_rows)

    partials = pl.pallas_call(
        kernel,
        out_shape=jax.ShapeDtypeStruct((num_tiles, 3 * _LANES), jnp.float32),
        grid_spec=pltpu.PrefetchScalarGridSpec(
            num_scalar_prefetch=0,
            grid=(num_tiles,),
            in_specs=[
                pl.BlockSpec((tile_rows, _LANES), lambda k: (k, 0)),
                pl.BlockSpec((tile_rows, _LANES), lambda k: (k, 0)),
            ],
            out_specs=pl.BlockSpec((1, 3 * _LANES), lambda k: (k, 0)),
        ),
        compiler_params=pltpu.CompilerParams(
            dimension_semantics=("parallel",),   # tiles independent -> megacore/v7x TCs
            vmem_limit_bytes=vmem_limit_bytes,
        ),
    )(pred_2d, label_2d)

    col = jnp.sum(partials, axis=0)              # (384,)  tiny cross-tile reduce in JAX
    inter = jnp.sum(col[:_LANES])
    psum = jnp.sum(col[_LANES:2 * _LANES])
    lsum = jnp.sum(col[2 * _LANES:])
    return inter, psum, lsum


def dice_loss_with_constant_correction(pred, label, smooth=1e-6,
                                       numerator=0.0, denominator=0.0,
                                       tile_rows=None):
    """Matches DiceLossWithConstantCorrection.forward(pred, label).

    `tile_rows` (multiple of 8) is only for testing / manual tuning; by default
    it is derived from the detected TPU generation.
    """
    p_flat = pred.reshape(-1)      # free reshape; keep native dtype (bf16/u8 ok)
    l_flat = label.reshape(-1)
    L = p_flat.shape[0]

    lane_pad = (-L) % _LANES
    if lane_pad:
        # Zero padding is exact for all three sums.  Only hit when numel is not
        # a multiple of 128 and costs one extra HBM pass.
        # TODO(synk): stream the ragged <128-element lane tail via manual DMA /
        # 1D blocks instead of this padded copy.
        p_flat = jnp.pad(p_flat, (0, lane_pad))
        l_flat = jnp.pad(l_flat, (0, lane_pad))

    R = (L + lane_pad) // _LANES
    pred_2d = p_flat.reshape(R, _LANES)          # free, lane-dense view
    label_2d = l_flat.reshape(R, _LANES)

    target_block_bytes, vmem_limit = _vmem_budget()
    if tile_rows is None:
        itemsize = max(pred_2d.dtype.itemsize, label_2d.dtype.itemsize)
        tile_rows = _pick_tile_rows(R, itemsize, target_block_bytes)

    inter, psum, lsum = _dice_sums(pred_2d, label_2d, tile_rows, vmem_limit)

    return (2.0 * inter + smooth + numerator) / (
        lsum + psum + smooth + denominator)


def _ref_loss(pred, label, smooth=1e-6, numerator=0.0, denominator=0.0):
    pf, lf = pred.reshape(-1).astype(jnp.float32), label.reshape(-1).astype(jnp.float32)
    return (2.0 * jnp.sum(lf * pf) + smooth + numerator) / (
        jnp.sum(lf) + jnp.sum(pf) + smooth + denominator)


if __name__ == "__main__":
    key = jax.random.PRNGKey(0)
    k1, k2, k3, k4, k5, k6 = jax.random.split(key, 6)

    # --- main case: (2, 4, 16, 16), numel % 128 == 0, single block, no mask ---
    N, C, H, W = 2, 4, 16, 16
    pred = jax.nn.sigmoid(jax.random.normal(k1, (N, C, H, W), dtype=jnp.float32))
    label = (jax.random.uniform(k2, (N, C, H, W)) > 0.5).astype(jnp.float32)

    loss_fn = jax.jit(dice_loss_with_constant_correction)
    loss = loss_fn(pred, label)
    jax.block_until_ready(loss)
    assert jnp.allclose(loss, _ref_loss(pred, label), rtol=1e-5, atol=1e-6), loss

    # --- lane-tail case: numel % 128 != 0 exercises the (rare) pad path ---
    pred2 = jax.nn.sigmoid(jax.random.normal(k3, (3, 5, 7, 11), dtype=jnp.float32))
    label2 = (jax.random.uniform(k4, (3, 5, 7, 11)) > 0.5).astype(jnp.float32)
    loss2 = loss_fn(pred2, label2)
    jax.block_until_ready(loss2)
    assert jnp.allclose(loss2, _ref_loss(pred2, label2), rtol=1e-5, atol=1e-6), loss2

    # --- ragged row-tile case: forced small tile -> over-hanging last block,
    #     exercises the pl.when-gated in-kernel mask path ---
    pred3 = jax.nn.sigmoid(jax.random.normal(k5, (17 * 128,), dtype=jnp.float32))
    label3 = (jax.random.uniform(k6, (17 * 128,)) > 0.5).astype(jnp.float32)
    loss_fn_small = jax.jit(functools.partial(dice_loss_with_constant_correction,
                                              tile_rows=8))
    loss3 = loss_fn_small(pred3, label3)
    jax.block_until_ready(loss3)
    assert jnp.allclose(loss3, _ref_loss(pred3, label3), rtol=1e-5, atol=1e-6), loss3

    print("KERNEL_OK")
</pallas_src>

<mosaic_0001>
module attributes {stable_mosaic.version = 11 : i64} {
  func.func @_dice_partials_kernel(%arg0: i32, %arg1: memref<16x128xf32, #tpu.memory_space<vmem>>, %arg2: memref<16x128xf32, #tpu.memory_space<vmem>>, %arg3: memref<1x384xf32, #tpu.memory_space<vmem>>) attributes {dimension_semantics = [#tpu.dimension_semantics<parallel>], iteration_bounds = array<i64: 1>, scalar_prefetch = 0 : i64, scratch_operands = 0 : i64, tpu.core_type = #tpu.core_type<tc>, window_params = [{transform_indices = @transform_0, window_bounds = array<i64: 16, 128>}, {transform_indices = @transform_1, window_bounds = array<i64: 16, 128>}, {transform_indices = @transform_2, window_bounds = array<i64: 1, 384>}]} {
    %c0 = arith.constant 0 : index
    %c0_0 = arith.constant 0 : index
    %0 = vector.load %arg1[%c0, %c0_0] : memref<16x128xf32, #tpu.memory_space<vmem>>, vector<16x128xf32>
    %c0_1 = arith.constant 0 : index
    %c0_2 = arith.constant 0 : index
    %1 = vector.load %arg2[%c0_1, %c0_2] : memref<16x128xf32, #tpu.memory_space<vmem>>, vector<16x128xf32>
    %2 = arith.mulf %0, %1 : vector<16x128xf32>
    %cst = arith.constant dense<0.000000e+00> : vector<128xf32>
    %3 = vector.multi_reduction <add>, %2, %cst [0] : vector<16x128xf32> to vector<128xf32>
    %4 = vector.shape_cast %3 : vector<128xf32> to vector<1x128xf32>
    %cst_3 = arith.constant dense<0.000000e+00> : vector<128xf32>
    %5 = vector.multi_reduction <add>, %0, %cst_3 [0] : vector<16x128xf32> to vector<128xf32>
    %6 = vector.shape_cast %5 : vector<128xf32> to vector<1x128xf32>
    %cst_4 = arith.constant dense<0.000000e+00> : vector<128xf32>
    %7 = vector.multi_reduction <add>, %1, %cst_4 [0] : vector<16x128xf32> to vector<128xf32>
    %8 = vector.shape_cast %7 : vector<128xf32> to vector<1x128xf32>
    %9 = tpu.concatenate %4, %6, %8 in 1 : vector<1x128xf32>, vector<1x128xf32>, vector<1x128xf32> -> vector<1x384xf32>
    %c0_5 = arith.constant 0 : index
    %c0_6 = arith.constant 0 : index
    %10 = vector.load %arg3[%c0_5, %c0_6] : memref<1x384xf32, #tpu.memory_space<vmem>>, vector<1x384xf32>
    tpu.vector_store %arg3[%c0_5, %c0_6], %9 {strides = array<i32>} : memref<1x384xf32, #tpu.memory_space<vmem>>, vector<1x384xf32>,
    return
  }
  func.func @transform_0(%arg0: i32) -> (i32, i32) {
    %c0_i32 = arith.constant 0 : i32
    %c0_i32_0 = arith.constant 0 : i32
    return %arg0, %c0_i32 : i32, i32
  }
  func.func @transform_1(%arg0: i32) -> (i32, i32) {
    %c0_i32 = arith.constant 0 : i32
    %c0_i32_0 = arith.constant 0 : i32
    return %arg0, %c0_i32 : i32, i32
  }
  func.func @transform_2(%arg0: i32) -> (i32, i32) {
    %c0_i32 = arith.constant 0 : i32
    %c0_i32_0 = arith.constant 0 : i32
    return %arg0, %c0_i32 : i32, i32
  }
}

</mosaic_0001>

<llo_original>
// kernel: dice_loss_with_constant_correction.1
$region0: #{dice_loss_with_constant_correction.1}
  #allocation0 [shape = 'u32[]', space=smem, size = 0x4, offset = 0x4, fixed_abs, tag = 'smem constant byte address 0x4 - core index']
  #allocation1 [shape = 'u32[72,128]{1,0:T(1,128)}', space=vmem, size = 0x9000, scoped, tag = 'internal scratch']
  %s0 = inlined_call_operand.vmem [shape: f32[16,128], index: 0, kind: input, shape index: {}]
  %s1 = inlined_call_operand.vmem [shape: f32[16,128], index: 1, kind: input, shape index: {}]
  %s2 = inlined_call_operand.vmem [shape: f32[1,384], index: 2, kind: output, shape index: {}]
  %s3 = sld [smem:[#allocation0]]
  $region18: #{dice_loss_with_constant_correction.1} parent=0
    _
  %s5 = ssub.s32 1, %s3
  %s6 = scalar_select 0, %s5, %s3
  // Predicated region
  $region2: #{dice_loss_with_constant_correction.1} parent=0 // pred_check
    _
  $region3: #{dice_loss_with_constant_correction.1} parent=0 // pred_check_branch
    %8 = sbr.rel (0) target = $region5
  $region4: #{dice_loss_with_constant_correction.1} parent=0 // pred_region
    _
  $region5: #{dice_loss_with_constant_correction.1} parent=0 // pred_fallthru
    _
  // Predicated region
  $region6: #{dice_loss_with_constant_correction.1} parent=0 // pred_check
    _
  $region7: #{dice_loss_with_constant_correction.1} parent=0 // pred_check_branch
    %10 = sbr.rel (0) target = $region9
  $region8: #{dice_loss_with_constant_correction.1} parent=0 // pred_region
    _
  $region9: #{dice_loss_with_constant_correction.1} parent=0 // pred_fallthru
    _
  %v11 = vld [vmem:[%s0] sm:$0xff]
  %v12 = vld [vmem:[%s0 + $0x8] sm:$0xff]
  %v13 = vld [vmem:[%s1] sm:$0xff]
  %v14 = vld [vmem:[%s1 + $0x8] sm:$0xff]
  %v15 = vmul.f32 %v11, %v13
  %v16 = vmul.f32 %v12, %v14
  %v17 = vadd.f32 %v15, %v16
  %v18 = vrot.slane %v17, 4
  %v19 = vadd.f32 %v17, %v18
  %v20 = vrot.slane %v19, 2
  %v21 = vadd.f32 %v19, %v20
  %v22 = vrot.slane %v21, 1
  %v23 = vadd.f32 %v21, %v22
  %v24 = vadd.f32 %v11, %v12
  %v25 = vrot.slane %v24, 4
  %v26 = vadd.f32 %v24, %v25
  %v27 = vrot.slane %v26, 2
  %v28 = vadd.f32 %v26, %v27
  %v29 = vrot.slane %v28, 1
  %v30 = vadd.f32 %v28, %v29
  %v31 = vadd.f32 %v13, %v14
  %v32 = vrot.slane %v31, 4
  %v33 = vadd.f32 %v31, %v32
  %v34 = vrot.slane %v33, 2
  %v35 = vadd.f32 %v33, %v34
  %v36 = vrot.slane %v35, 1
  %v37 = vadd.f32 %v35, %v36
  %v41 = vrot.slane %v30, 7
  %v42 = vrot.slane %v37, 6
  %vm43 = vcmask 1040384
  %v44 = vsel %vm43, %v23, %v41
  %vm45 = vcmask 1041408
  %v46 = vsel %vm45, %v44, %v42
  %v48 = vlaneseq
  %vm49 = vcmp.ge.s32.totalorder %v48, 0
  %vm50 = vcmp.lt.s32.totalorder %v48, 384
  %vm51 = vmand %vm49, %vm50
  %52 = vst.msk [vmem:[%s2] sm:$0x7] %vm51, %v46
  // Predicated region
  $region10: #{dice_loss_with_constant_correction.1} parent=0 // pred_check
    _
  $region11: #{dice_loss_with_constant_correction.1} parent=0 // pred_check_branch
    %54 = sbr.rel (0) target = $region13
  $region12: #{dice_loss_with_constant_correction.1} parent=0 // pred_region
    _
  $region13: #{dice_loss_with_constant_correction.1} parent=0 // pred_fallthru
    _
  // Predicated region
  $region14: #{dice_loss_with_constant_correction.1} parent=0 // pred_check
    _
  $region15: #{dice_loss_with_constant_correction.1} parent=0 // pred_check_branch
    %56 = sbr.rel (0) target = $region17
  $region16: #{dice_loss_with_constant_correction.1} parent=0 // pred_region
    _
  $region17: #{dice_loss_with_constant_correction.1} parent=0 // pred_fallthru
    _

</llo_original>
